<compile_context>
chip_gen: v6e
topology: v6e:2x2x1
jax: 0.10.0
libtpu: 0.0.40
codegen_flags: <defaults>
</compile_context>

<pallas_src>
import jax
import jax.numpy as jnp
from jax.experimental import pallas as pl
from jax.experimental.pallas import tpu as pltpu


def _round_up(x, m):
    return ((x + m - 1) // m) * m


def _policy_kernel(xT_ref, w1T_ref, b1T_ref, w2T_ref, b2T_ref, w3T_ref, b3T_ref,
                   meansT_ref):
    # Transposed problem: features on sublanes, batch tile on the lane axis.
    cdt = w1T_ref.dtype
    xT = xT_ref[...].astype(cdt)                                    # (IN, tb) bf16

    # Layer 1: h1^T = relu(W1^T @ x^T + b1)   -> (H, tb), f32 epilogue.
    h1 = jnp.dot(w1T_ref[...], xT,
                 preferred_element_type=jnp.float32) + b1T_ref[...]
    h1 = jnp.maximum(h1, 0.0).astype(cdt)

    # Layer 2: h2^T = relu(W2^T @ h1^T + b2)  -> (H, tb).
    h2 = jnp.dot(w2T_ref[...], h1,
                 preferred_element_type=jnp.float32) + b2T_ref[...]
    h2 = jnp.maximum(h2, 0.0).astype(cdt)

    # Mean head: means^T = W3^T @ h2^T + b3   -> (A_P, tb), lane-dense store.
    m = jnp.dot(w3T_ref[...], h2,
                preferred_element_type=jnp.float32) + b3T_ref[...]
    meansT_ref[...] = m.astype(meansT_ref.dtype)


def prepare_params(params, compute_dtype=jnp.bfloat16):
    """One-time transpose / zero-pad / cast of the weights (hoisted out of the
    per-call path).  Zero padding of the action rows is exact."""
    A = params["w3"].shape[1]
    A_P = _round_up(A, 8)                     # sublane-pad the tiny action dim
    f32 = jnp.float32
    return {
        "w1T": params["w1"].T.astype(compute_dtype),                   # (H, IN)
        "b1T": params["b1"].T.astype(f32),                             # (H, 1)
        "w2T": params["w2"].T.astype(compute_dtype),                   # (H, H)
        "b2T": params["b2"].T.astype(f32),                             # (H, 1)
        "w3T": jnp.pad(params["w3"].T,
                       ((0, A_P - A), (0, 0))).astype(compute_dtype),  # (A_P, H)
        "b3T": jnp.pad(params["b3"].T,
                       ((0, A_P - A), (0, 0))).astype(f32),            # (A_P, 1)
        "sigma_param": params["sigma_param"].astype(f32),              # (A,)
    }


def continuous_policy_forward(x, prepped, *, max_batch_tile=1024):
    """x: [B, n_inputs] float32. prepped: output of prepare_params().
    Returns (means [B, n_actions], sigma [n_actions])."""
    B, IN = x.shape
    H, IN_w = prepped["w1T"].shape
    assert IN == IN_w
    A_P = prepped["w3T"].shape[0]
    A = prepped["sigma_param"].shape[0]
    f32 = jnp.float32

    # Batch tile on the lane axis: multiple of 128, as large as max_batch_tile,
    # but capped so large batches give >= 2 grid steps (keeps both v7x TCs busy).
    half = -(-B // 2)
    tb = min(max_batch_tile, max(128, _round_up(half, 128)))
    B_pad = _round_up(B, tb)

    # Only x needs a per-call transform: tiny [B, IN] transpose + lane pad,
    # kept in f32 (cast to bf16 inside the kernel).
    xT = jnp.pad(x.T, ((0, 0), (0, B_pad - B)))                      # (IN, B_pad) f32

    grid = (B_pad // tb,)

    cost = pl.CostEstimate(
        flops=2 * B_pad * (IN * H + H * H + H * A_P),
        transcendentals=0,
        bytes_accessed=(IN * B_pad * 4                    # xT read
                        + A_P * B_pad * 4                 # means^T write
                        + (H * IN + H * H + A_P * H) * 2  # bf16 weights
                        + (2 * H + A_P) * 4),             # f32 biases
    )

    meansT = pl.pallas_call(
        _policy_kernel,
        out_shape=jax.ShapeDtypeStruct((A_P, B_pad), f32),
        grid_spec=pltpu.PrefetchScalarGridSpec(
            num_scalar_prefetch=0,
            grid=grid,
            in_specs=[
                pl.BlockSpec((IN, tb), lambda i: (0, i)),    # x^T tile (batch on lanes)
                pl.BlockSpec((H, IN), lambda i: (0, 0)),     # W1^T (resident)
                pl.BlockSpec((H, 1), lambda i: (0, 0)),      # b1
                pl.BlockSpec((H, H), lambda i: (0, 0)),      # W2^T
                pl.BlockSpec((H, 1), lambda i: (0, 0)),      # b2
                pl.BlockSpec((A_P, H), lambda i: (0, 0)),    # W3^T (row-padded)
                pl.BlockSpec((A_P, 1), lambda i: (0, 0)),    # b3
            ],
            out_specs=pl.BlockSpec((A_P, tb), lambda i: (0, i)),  # lane-dense means^T
        ),
        compiler_params=pltpu.CompilerParams(
            dimension_semantics=("parallel",),     # shard batch tiles across TCs (v7x)
            vmem_limit_bytes=32 * 1024 * 1024,
        ),
        cost_estimate=cost,
    )(xT, prepped["w1T"], prepped["b1T"], prepped["w2T"], prepped["b2T"],
      prepped["w3T"], prepped["b3T"])

    means = meansT[:A, :B].T                                        # [B, A]
    # State-independent sigma: 2-element softplus, hoisted out of the kernel.
    sigma = jax.nn.softplus(prepped["sigma_param"])
    return means, sigma


def init_params(key, n_inputs, n_hidden, n_actions):
    """Deterministic synthetic initialization (shapes match the PyTorch module)."""
    k1, k2, k3, k4, k5, k6 = jax.random.split(key, 6)
    s1 = 1.0 / jnp.sqrt(n_inputs)
    s2 = 1.0 / jnp.sqrt(n_hidden)
    return {
        # stored as [in, out] (transpose of torch.nn.Linear.weight)
        "w1": jax.random.uniform(k1, (n_inputs, n_hidden), jnp.float32, -s1, s1),
        "b1": jax.random.uniform(k2, (1, n_hidden), jnp.float32, -s1, s1),
        "w2": jax.random.uniform(k3, (n_hidden, n_hidden), jnp.float32, -s2, s2),
        "b2": jax.random.uniform(k4, (1, n_hidden), jnp.float32, -s2, s2),
        "w3": jax.random.uniform(k5, (n_hidden, n_actions), jnp.float32, -s2, s2),
        "b3": jax.random.uniform(k6, (1, n_actions), jnp.float32, -s2, s2),
        # nn.Parameter(torch.zeros(n_actions))
        "sigma_param": jnp.zeros((n_actions,), jnp.float32),
    }


def _reference_forward(x, params, compute_dtype=jnp.bfloat16):
    """Pure-JAX reference using the same bf16 matmul-operand quantization."""
    f32 = jnp.float32
    q = lambda a: a.astype(compute_dtype).astype(f32)
    h1 = jnp.maximum(q(x) @ q(params["w1"]) + params["b1"], 0.0)
    h2 = jnp.maximum(q(h1) @ q(params["w2"]) + params["b2"], 0.0)
    means = q(h2) @ q(params["w3"]) + params["b3"]
    sigma = jax.nn.softplus(params["sigma_param"])
    return means, sigma


if __name__ == "__main__":
    # Small shapes consistent with a gym continuous-control env:
    # observation dim = 4, hidden = 16, action dim = 2.
    n_inputs, n_hidden, n_actions = 4, 16, 2

    key = jax.random.PRNGKey(0)
    k_obs, k_par = jax.random.split(key)
    params = init_params(k_par, n_inputs, n_hidden, n_actions)
    prepped = prepare_params(params)          # one-time pad/transpose/cast

    fwd = jax.jit(continuous_policy_forward)

    # 1) Small batch (single grid step, tb = 128 lanes).
    batch = 2
    x_small = jax.random.normal(k_obs, (batch, n_inputs), jnp.float32)
    means, sigma = fwd(x_small, prepped)
    jax.block_until_ready((means, sigma))
    ref_means, ref_sigma = _reference_forward(x_small, params)
    assert means.shape == (batch, n_actions)
    assert sigma.shape == (n_actions,)
    assert jnp.allclose(means, ref_means, atol=2e-4, rtol=2e-4)
    assert jnp.allclose(sigma, ref_sigma, atol=1e-6, rtol=1e-6)

    # 2) Batch not a multiple of the tile: exercises the pad + slice path (2 steps).
    x_mid = jax.random.normal(jax.random.PRNGKey(1), (300, n_inputs), jnp.float32)
    means_m, _ = fwd(x_mid, prepped)
    jax.block_until_ready(means_m)
    ref_means_m, _ = _reference_forward(x_mid, params)
    assert means_m.shape == (300, n_actions)
    assert jnp.allclose(means_m, ref_means_m, atol=2e-4, rtol=2e-4)

    # 3) Larger batch: big lane-dense tiles, multi-step double-buffered grid.
    big_batch = 2048
    x_big = jax.random.normal(jax.random.PRNGKey(2), (big_batch, n_inputs), jnp.float32)
    means_b, _ = fwd(x_big, prepped)
    jax.block_until_ready(means_b)
    ref_means_b, _ = _reference_forward(x_big, params)
    assert means_b.shape == (big_batch, n_actions)
    assert jnp.allclose(means_b, ref_means_b, atol=2e-4, rtol=2e-4)

    print("KERNEL_OK")
</pallas_src>

<mosaic_0001>
module attributes {stable_mosaic.version = 11 : i64} {
  func.func @_policy_kernel(%arg0: i32, %arg1: memref<4x128xf32, #tpu.memory_space<vmem>>, %arg2: memref<16x4xbf16, #tpu.memory_space<vmem>>, %arg3: memref<16x1xf32, #tpu.memory_space<vmem>>, %arg4: memref<16x16xbf16, #tpu.memory_space<vmem>>, %arg5: memref<16x1xf32, #tpu.memory_space<vmem>>, %arg6: memref<8x16xbf16, #tpu.memory_space<vmem>>, %arg7: memref<8x1xf32, #tpu.memory_space<vmem>>, %arg8: memref<8x128xf32, #tpu.memory_space<vmem>>) attributes {dimension_semantics = [#tpu.dimension_semantics<parallel>], iteration_bounds = array<i64: 1>, scalar_prefetch = 0 : i64, scratch_operands = 0 : i64, tpu.core_type = #tpu.core_type<tc>, window_params = [{transform_indices = @transform_0, window_bounds = array<i64: 4, 128>}, {pipeline_mode = #tpu.pipeline_mode<synchronous>, transform_indices = @transform_1, window_bounds = array<i64: 16, 4>}, {pipeline_mode = #tpu.pipeline_mode<synchronous>, transform_indices = @transform_2, window_bounds = array<i64: 16, 1>}, {pipeline_mode = #tpu.pipeline_mode<synchronous>, transform_indices = @transform_3, window_bounds = array<i64: 16, 16>}, {pipeline_mode = #tpu.pipeline_mode<synchronous>, transform_indices = @transform_4, window_bounds = array<i64: 16, 1>}, {pipeline_mode = #tpu.pipeline_mode<synchronous>, transform_indices = @transform_5, window_bounds = array<i64: 8, 16>}, {pipeline_mode = #tpu.pipeline_mode<synchronous>, transform_indices = @transform_6, window_bounds = array<i64: 8, 1>}, {transform_indices = @transform_7, window_bounds = array<i64: 8, 128>}]} {
    %c0 = arith.constant 0 : index
    %c0_0 = arith.constant 0 : index
    %0 = vector.load %arg1[%c0, %c0_0] : memref<4x128xf32, #tpu.memory_space<vmem>>, vector<4x128xf32>
    %1 = arith.truncf %0 : vector<4x128xf32> to vector<4x128xbf16>
    %c0_1 = arith.constant 0 : index
    %c0_2 = arith.constant 0 : index
    %2 = vector.load %arg2[%c0_1, %c0_2] : memref<16x4xbf16, #tpu.memory_space<vmem>>, vector<16x4xbf16>
    %cst = arith.constant dense<0.000000e+00> : vector<16x128xf32>
    %3 = tpu.matmul %2, %1, %cst {dimension_numbers = #tpu.dot_dimension_numbers<[1], [0], [0], [1], [0, 0, 1, 1], [], []>} : vector<16x4xbf16>, vector<4x128xbf16>, vector<16x128xf32> -> vector<16x128xf32>
    %c0_3 = arith.constant 0 : index
    %c0_4 = arith.constant 0 : index
    %4 = vector.load %arg3[%c0_3, %c0_4] : memref<16x1xf32, #tpu.memory_space<vmem>>, vector<16x1xf32>
    %5 = vector.broadcast %4 : vector<16x1xf32> to vector<16x128xf32>
    %6 = arith.addf %3, %5 : vector<16x128xf32>
    %cst_5 = arith.constant 0.000000e+00 : f32
    %7 = vector.broadcast %cst_5 : f32 to vector<16x128xf32>
    %8 = arith.maximumf %6, %7 : vector<16x128xf32>
    %9 = arith.truncf %8 : vector<16x128xf32> to vector<16x128xbf16>
    %c0_6 = arith.constant 0 : index
    %c0_7 = arith.constant 0 : index
    %10 = vector.load %arg4[%c0_6, %c0_7] : memref<16x16xbf16, #tpu.memory_space<vmem>>, vector<16x16xbf16>
    %cst_8 = arith.constant dense<0.000000e+00> : vector<16x128xf32>
    %11 = tpu.matmul %10, %9, %cst_8 {dimension_numbers = #tpu.dot_dimension_numbers<[1], [0], [0], [1], [0, 0, 1, 1], [], []>} : vector<16x16xbf16>, vector<16x128xbf16>, vector<16x128xf32> -> vector<16x128xf32>
    %c0_9 = arith.constant 0 : index
    %c0_10 = arith.constant 0 : index
    %12 = vector.load %arg5[%c0_9, %c0_10] : memref<16x1xf32, #tpu.memory_space<vmem>>, vector<16x1xf32>
    %13 = vector.broadcast %12 : vector<16x1xf32> to vector<16x128xf32>
    %14 = arith.addf %11, %13 : vector<16x128xf32>
    %cst_11 = arith.constant 0.000000e+00 : f32
    %15 = vector.broadcast %cst_11 : f32 to vector<16x128xf32>
    %16 = arith.maximumf %14, %15 : vector<16x128xf32>
    %17 = arith.truncf %16 : vector<16x128xf32> to vector<16x128xbf16>
    %c0_12 = arith.constant 0 : index
    %c0_13 = arith.constant 0 : index
    %18 = vector.load %arg6[%c0_12, %c0_13] : memref<8x16xbf16, #tpu.memory_space<vmem>>, vector<8x16xbf16>
    %cst_14 = arith.constant dense<0.000000e+00> : vector<8x128xf32>
    %19 = tpu.matmul %18, %17, %cst_14 {dimension_numbers = #tpu.dot_dimension_numbers<[1], [0], [0], [1], [0, 0, 1, 1], [], []>} : vector<8x16xbf16>, vector<16x128xbf16>, vector<8x128xf32> -> vector<8x128xf32>
    %c0_15 = arith.constant 0 : index
    %c0_16 = arith.constant 0 : index
    %20 = vector.load %arg7[%c0_15, %c0_16] : memref<8x1xf32, #tpu.memory_space<vmem>>, vector<8x1xf32>
    %21 = vector.broadcast %20 : vector<8x1xf32> to vector<8x128xf32>
    %22 = arith.addf %19, %21 : vector<8x128xf32>
    %c0_17 = arith.constant 0 : index
    %c0_18 = arith.constant 0 : index
    %23 = vector.load %arg8[%c0_17, %c0_18] : memref<8x128xf32, #tpu.memory_space<vmem>>, vector<8x128xf32>
    tpu.vector_store %arg8[%c0_17, %c0_18], %22 {strides = array<i32>} : memref<8x128xf32, #tpu.memory_space<vmem>>, vector<8x128xf32>,
    return
  }
  func.func @transform_0(%arg0: i32) -> (i32, i32) {
    %c0_i32 = arith.constant 0 : i32
    %c0_i32_0 = arith.constant 0 : i32
    return %c0_i32, %arg0 : i32, i32
  }
  func.func @transform_1(%arg0: i32) -> (i32, i32) {
    %c0_i32 = arith.constant 0 : i32
    %c0_i32_0 = arith.constant 0 : i32
    %c0_i32_1 = arith.constant 0 : i32
    return %c0_i32, %c0_i32_0 : i32, i32
  }
  func.func @transform_2(%arg0: i32) -> (i32, i32) {
    %c0_i32 = arith.constant 0 : i32
    %c0_i32_0 = arith.constant 0 : i32
    %c0_i32_1 = arith.constant 0 : i32
    return %c0_i32, %c0_i32_0 : i32, i32
  }
  func.func @transform_3(%arg0: i32) -> (i32, i32) {
    %c0_i32 = arith.constant 0 : i32
    %c0_i32_0 = arith.constant 0 : i32
    %c0_i32_1 = arith.constant 0 : i32
    return %c0_i32, %c0_i32_0 : i32, i32
  }
  func.func @transform_4(%arg0: i32) -> (i32, i32) {
    %c0_i32 = arith.constant 0 : i32
    %c0_i32_0 = arith.constant 0 : i32
    %c0_i32_1 = arith.constant 0 : i32
    return %c0_i32, %c0_i32_0 : i32, i32
  }
  func.func @transform_5(%arg0: i32) -> (i32, i32) {
    %c0_i32 = arith.constant 0 : i32
    %c0_i32_0 = arith.constant 0 : i32
    %c0_i32_1 = arith.constant 0 : i32
    return %c0_i32, %c0_i32_0 : i32, i32
  }
  func.func @transform_6(%arg0: i32) -> (i32, i32) {
    %c0_i32 = arith.constant 0 : i32
    %c0_i32_0 = arith.constant 0 : i32
    %c0_i32_1 = arith.constant 0 : i32
    return %c0_i32, %c0_i32_0 : i32, i32
  }
  func.func @transform_7(%arg0: i32) -> (i32, i32) {
    %c0_i32 = arith.constant 0 : i32
    %c0_i32_0 = arith.constant 0 : i32
    return %c0_i32, %arg0 : i32, i32
  }
}

</mosaic_0001>

<llo_original>
// kernel: continuous_policy_forward.1
$region0: #{continuous_policy_forward.1}
  #allocation0 [shape = 'u32[]', space=smem, size = 0x4, offset = 0x4, fixed_abs, tag = 'smem constant byte address 0x4 - core index']
  #allocation1 [shape = 'u32[144,128]{1,0:T(1,128)}', space=vmem, size = 0x12000, scoped, tag = 'internal scratch']
  %s0 = inlined_call_operand.vmem [shape: f32[4,128], index: 0, kind: input, shape index: {}]
  %s1 = inlined_call_operand.vmem [shape: bf16[16,4], index: 1, kind: input, shape index: {}]
  %s2 = inlined_call_operand.vmem [shape: f32[16,1], index: 2, kind: input, shape index: {}]
  %s3 = inlined_call_operand.vmem [shape: bf16[16,16], index: 3, kind: input, shape index: {}]
  %s4 = inlined_call_operand.vmem [shape: f32[16,1], index: 4, kind: input, shape index: {}]
  %s5 = inlined_call_operand.vmem [shape: bf16[8,16], index: 5, kind: input, shape index: {}]
  %s6 = inlined_call_operand.vmem [shape: f32[8,1], index: 6, kind: input, shape index: {}]
  %s7 = inlined_call_operand.vmem [shape: f32[8,128], index: 7, kind: output, shape index: {}]
  %s8 = sld [smem:[#allocation0]]
  $region38: #{continuous_policy_forward.1} parent=0
    _
  %s10 = ssub.s32 1, %s8
  %s11 = scalar_select 0, %s10, %s8
  // Predicated region
  $region2: #{continuous_policy_forward.1} parent=0 // pred_check
    _
  $region3: #{continuous_policy_forward.1} parent=0 // pred_check_branch
    %13 = sbr.rel (0) target = $region5
  $region4: #{continuous_policy_forward.1} parent=0 // pred_region
    _
  $region5: #{continuous_policy_forward.1} parent=0 // pred_fallthru
    _
  // Predicated region
  $region6: #{continuous_policy_forward.1} parent=0 // pred_check
    _
  $region7: #{continuous_policy_forward.1} parent=0 // pred_check_branch
    %15 = sbr.rel (0) target = $region9
  $region8: #{continuous_policy_forward.1} parent=0 // pred_region
    _
  $region9: #{continuous_policy_forward.1} parent=0 // pred_fallthru
    _
  // Predicated region
  $region10: #{continuous_policy_forward.1} parent=0 // pred_check
    _
  $region11: #{continuous_policy_forward.1} parent=0 // pred_check_branch
    %17 = sbr.rel (0) target = $region13
  $region12: #{continuous_policy_forward.1} parent=0 // pred_region
    _
  $region13: #{continuous_policy_forward.1} parent=0 // pred_fallthru
    _
  // Predicated region
  $region14: #{continuous_policy_forward.1} parent=0 // pred_check
    _
  $region15: #{continuous_policy_forward.1} parent=0 // pred_check_branch
    %19 = sbr.rel (0) target = $region17
  $region16: #{continuous_policy_forward.1} parent=0 // pred_region
    _
  $region17: #{continuous_policy_forward.1} parent=0 // pred_fallthru
    _
  // Predicated region
  $region18: #{continuous_policy_forward.1} parent=0 // pred_check
    _
  $region19: #{continuous_policy_forward.1} parent=0 // pred_check_branch
    %21 = sbr.rel (0) target = $region21
  $region20: #{continuous_policy_forward.1} parent=0 // pred_region
    _
  $region21: #{continuous_policy_forward.1} parent=0 // pred_fallthru
    _
  // Predicated region
  $region22: #{continuous_policy_forward.1} parent=0 // pred_check
    _
  $region23: #{continuous_policy_forward.1} parent=0 // pred_check_branch
    %23 = sbr.rel (0) target = $region25
  $region24: #{continuous_policy_forward.1} parent=0 // pred_region
    _
  $region25: #{continuous_policy_forward.1} parent=0 // pred_fallthru
    _
  // Predicated region
  $region26: #{continuous_policy_forward.1} parent=0 // pred_check
    _
  $region27: #{continuous_policy_forward.1} parent=0 // pred_check_branch
    %25 = sbr.rel (0) target = $region29
  $region28: #{continuous_policy_forward.1} parent=0 // pred_region
    _
  $region29: #{continuous_policy_forward.1} parent=0 // pred_fallthru
    _
  %v27 = vld [vmem:[%s0] sm:$0xf]
  %v28 = vpack.c.bf16 %v27, %v27
  %v29 = vld [vmem:[%s1] sm:$0xf]
  %v30 = vld [vmem:[%s1 + $0x4] sm:$0xf]
  %v31 = vld [vmem:[%s2] sm:$0xff]
  %v32 = vld [vmem:[%s2 + $0x8] sm:$0xff]
  %34 = vset.pattern.permute.xlu0 0
  %35 = vperm.xlu0 %34, %v31
  %v36 = vpop.permute.xlu0 %35
  %39 = vset.pattern.permute.xlu0 0
  %40 = vperm.xlu0 %39, %v32
  %v41 = vpop.permute.xlu0 %40
  %v45 = vunpack.c.l.b16 %v29
  %v46 = vunpack.c.l.b16 %v30
  %v47 = vpack.c.b16 %v46, %v45
  %vm48 = vcmask 31744
  %v50 = vsel %vm48, %v47, 0
  %vm52 = vcmask 1041408
  %v54 = vsel %vm52, %v28, 0
  %56 = vmatprep.subr.bf16.mxu0 0
  %57 = vmatpush1.bf16.msra.mxu0 0
  %58 = vmatprep.subr.bf16.mxu0 0
  %59 = vmatpush1.bf16.msra.mxu0 0
  %60 = vmatprep.subr.bf16.mxu0 0
  %61 = vmatpush1.bf16.msra.mxu0 0
  %62 = vmatprep.subr.bf16.mxu0 0
  %63 = vmatpush1.bf16.msra.mxu0 0
  %64 = vmatprep.subr.bf16.mxu0 0
  %65 = vmatpush1.bf16.msra.mxu0 0
  %66 = vmatprep.subr.bf16.mxu0 0
  %67 = vmatpush1.bf16.msra.mxu0 0
  %68 = vmatprep.subr.bf16.mxu0 0
  %69 = vmatpush1.bf16.msra.mxu0 0
  %70 = vmatprep.subr.bf16.mxu0 0
  %71 = vmatpush1.bf16.msra.mxu0 %v54
  %72 = vmatprep.subr.bf16.mxu0 0
  %73 = vmatpush2.bf16.msra.mxu0 0
  %74 = vmatprep.subr.bf16.mxu0 0
  %75 = vmatpush2.bf16.msra.mxu0 0
  %76 = vmatprep.subr.bf16.mxu0 0
  %77 = vmatpush2.bf16.msra.mxu0 0
  %78 = vmatprep.subr.bf16.mxu0 0
  %79 = vmatpush2.bf16.msra.mxu0 0
  %80 = vmatprep.subr.bf16.mxu0 0
  %81 = vmatpush2.bf16.msra.mxu0 0
  %82 = vmatprep.subr.bf16.mxu0 0
  %83 = vmatpush2.bf16.msra.mxu0 0
  %84 = vmatprep.subr.bf16.mxu0 0
  %85 = vmatpush2.bf16.msra.mxu0 0
  %86 = vmatprep.subr.bf16.mxu0 0
  %87 = vmatpush2.bf16.msra.mxu0 0
  %88 = vmatprep.mubr.bf16.mxu0 0
  %89 = vmatmul.mubr.bf16.gmra.mxu0 %v50
  %v90 = vpop.f32.mrf.mxu0
  %v91 = vadd.f32 %v36, %v90
  %v92 = vpop.f32.mrf.mxu0
  %v93 = vpop.f32.mrf.mxu0
  %v94 = vadd.f32 %v41, %v93
  %v95 = vpop.f32.mrf.mxu0
  %96 = vdwg.mxu0
  %v97 = vmax.f32 %v91, 0.0
  %v98 = vmax.f32 %v94, 0.0
  %v99 = vpack.c.bf16 %v98, %v97
  %v100 = vld [vmem:[%s3] sm:$0xf]
  %v101 = vld [vmem:[%s3 + $0x4] sm:$0xf]
  %v102 = vld [vmem:[%s4] sm:$0xff]
  %v103 = vld [vmem:[%s4 + $0x8] sm:$0xff]
  %105 = vset.pattern.permute.xlu0 0
  %106 = vperm.xlu0 %105, %v102
  %v107 = vpop.permute.xlu0 %106
  %110 = vset.pattern.permute.xlu0 0
  %111 = vperm.xlu0 %110, %v103
  %v112 = vpop.permute.xlu0 %111
  %v116 = vunpack.c.l.b16 %v100
  %v117 = vunpack.c.l.b16 %v101
  %v118 = vpack.c.b16 %v117, %v116
  %vm119 = vcmask 130048
  %v121 = vsel %vm119, %v118, 0
  %123 = vmatprep.subr.bf16.mxu0 0
  %124 = vmatpush1.bf16.msra.mxu0 0
  %125 = vmatprep.subr.bf16.mxu0 0
  %126 = vmatpush1.bf16.msra.mxu0 0
  %127 = vmatprep.subr.bf16.mxu0 0
  %128 = vmatpush1.bf16.msra.mxu0 0
  %129 = vmatprep.subr.bf16.mxu0 0
  %130 = vmatpush1.bf16.msra.mxu0 0
  %131 = vmatprep.subr.bf16.mxu0 0
  %132 = vmatpush1.bf16.msra.mxu0 0
  %133 = vmatprep.subr.bf16.mxu0 0
  %134 = vmatpush1.bf16.msra.mxu0 0
  %135 = vmatprep.subr.bf16.mxu0 0
  %136 = vmatpush1.bf16.msra.mxu0 0
  %137 = vmatprep.subr.bf16.mxu0 0
  %138 = vmatpush1.bf16.msra.mxu0 %v99
  %139 = vmatprep.subr.bf16.mxu0 0
  %140 = vmatpush2.bf16.msra.mxu0 0
  %141 = vmatprep.subr.bf16.mxu0 0
  %142 = vmatpush2.bf16.msra.mxu0 0
  %143 = vmatprep.subr.bf16.mxu0 0
  %144 = vmatpush2.bf16.msra.mxu0 0
  %145 = vmatprep.subr.bf16.mxu0 0
  %146 = vmatpush2.bf16.msra.mxu0 0
  %147 = vmatprep.subr.bf16.mxu0 0
  %148 = vmatpush2.bf16.msra.mxu0 0
  %149 = vmatprep.subr.bf16.mxu0 0
  %150 = vmatpush2.bf16.msra.mxu0 0
  %151 = vmatprep.subr.bf16.mxu0 0
  %152 = vmatpush2.bf16.msra.mxu0 0
  %153 = vmatprep.subr.bf16.mxu0 0
  %154 = vmatpush2.bf16.msra.mxu0 0
  %155 = vmatprep.mubr.bf16.mxu0 0
  %156 = vmatmul.mubr.bf16.gmra.mxu0 %v121
  %v157 = vpop.f32.mrf.mxu0
  %v158 = vadd.f32 %v107, %v157
  %v159 = vpop.f32.mrf.mxu0
  %v160 = vpop.f32.mrf.mxu0
  %v161 = vadd.f32 %v112, %v160
  %v162 = vpop.f32.mrf.mxu0
  %163 = vdwg.mxu0
  %v164 = vmax.f32 %v158, 0.0
  %v165 = vmax.f32 %v161, 0.0
  %v166 = vpack.c.bf16 %v165, %v164
  %v167 = vld [vmem:[%s5] sm:$0xf]
  %v168 = vld [vmem:[%s6] sm:$0xff]
  %170 = vset.pattern.permute.xlu0 0
  %171 = vperm.xlu0 %170, %v168
  %v172 = vpop.permute.xlu0 %171
  %v175 = vsel %vm119, %v167, 0
  %177 = vmatprep.subr.bf16.mxu0 0
  %178 = vmatpush1.bf16.msra.mxu0 0
  %179 = vmatprep.subr.bf16.mxu0 0
  %180 = vmatpush1.bf16.msra.mxu0 0
  %181 = vmatprep.subr.bf16.mxu0 0
  %182 = vmatpush1.bf16.msra.mxu0 0
  %183 = vmatprep.subr.bf16.mxu0 0
  %184 = vmatpush1.bf16.msra.mxu0 0
  %185 = vmatprep.subr.bf16.mxu0 0
  %186 = vmatpush1.bf16.msra.mxu0 0
  %187 = vmatprep.subr.bf16.mxu0 0
  %188 = vmatpush1.bf16.msra.mxu0 0
  %189 = vmatprep.subr.bf16.mxu0 0
  %190 = vmatpush1.bf16.msra.mxu0 0
  %191 = vmatprep.subr.bf16.mxu0 0
  %192 = vmatpush1.bf16.msra.mxu0 %v166
  %193 = vmatprep.subr.bf16.mxu0 0
  %194 = vmatpush2.bf16.msra.mxu0 0
  %195 = vmatprep.subr.bf16.mxu0 0
  %196 = vmatpush2.bf16.msra.mxu0 0
  %197 = vmatprep.subr.bf16.mxu0 0
  %198 = vmatpush2.bf16.msra.mxu0 0
  %199 = vmatprep.subr.bf16.mxu0 0
  %200 = vmatpush2.bf16.msra.mxu0 0
  %201 = vmatprep.subr.bf16.mxu0 0
  %202 = vmatpush2.bf16.msra.mxu0 0
  %203 = vmatprep.subr.bf16.mxu0 0
  %204 = vmatpush2.bf16.msra.mxu0 0
  %205 = vmatprep.subr.bf16.mxu0 0
  %206 = vmatpush2.bf16.msra.mxu0 0
  %207 = vmatprep.subr.bf16.mxu0 0
  %208 = vmatpush2.bf16.msra.mxu0 0
  %209 = vmatprep.mubr.bf16.mxu0 0
  %210 = vmatmul.mubr.bf16.gmra.mxu0 %v175
  %v211 = vpop.f32.mrf.mxu0
  %v212 = vadd.f32 %v172, %v211
  %v213 = vpop.f32.mrf.mxu0
  %v214 = vpop.f32.mrf.mxu0
  %v215 = vpop.f32.mrf.mxu0
  %216 = vdwg.mxu0
  %217 = vst [vmem:[%s7] sm:$0xff] %v212
  // Predicated region
  $region30: #{continuous_policy_forward.1} parent=0 // pred_check
    _
  $region31: #{continuous_policy_forward.1} parent=0 // pred_check_branch
    %219 = sbr.rel (0) target = $region33
  $region32: #{continuous_policy_forward.1} parent=0 // pred_region
    _
  $region33: #{continuous_policy_forward.1} parent=0 // pred_fallthru
    _
  // Predicated region
  $region34: #{continuous_policy_forward.1} parent=0 // pred_check
    _
  $region35: #{continuous_policy_forward.1} parent=0 // pred_check_branch
    %221 = sbr.rel (0) target = $region37
  $region36: #{continuous_policy_forward.1} parent=0 // pred_region
    _
  $region37: #{continuous_policy_forward.1} parent=0 // pred_fallthru
    _

</llo_original>
